<compile_context>
chip_gen: v7x
topology: tpu7x:2x2x1
jax: 0.10.0
libtpu: 0.0.40
codegen_flags: <defaults>
</compile_context>

<pallas_src>
import jax
import jax.numpy as jnp
from jax.experimental import pallas as pl
from jax.experimental.pallas import tpu as pltpu

IN_DIM = 572
HID = 128
OUT_DIM = 1
K_PAD = 640  # 5 * 128: MXU-aligned contraction dim for layer 0


def _round_up(x, m):
    return ((x + m - 1) // m) * m


def _mlp_kernel(x_ref,
                w0_ref, b0_ref,
                w1_ref, b1_ref,
                w2_ref, b2_ref,
                w3_ref, b3_ref,
                w4_ref, b4_ref,
                o_ref,
                xb_ref):
    tb = xb_ref.shape[0]

    # Build an MXU-aligned (TB, 640) bf16 copy of the f32 input tile in VMEM.
    # Zero the pad lanes every step: trivial VMEM traffic, and it keeps the kernel
    # correct when the parallel grid axis is split across TensorCores.
    xb_ref[:, IN_DIM:] = jnp.zeros((tb, K_PAD - IN_DIM), jnp.bfloat16)
    xb_ref[:, :IN_DIM] = x_ref[...].astype(jnp.bfloat16)

    # Layer 0: (TB, 640) bf16 @ (640, 128) bf16 -> f32; bias + ReLU in f32.
    h = jnp.dot(xb_ref[...], w0_ref[...], preferred_element_type=jnp.float32)
    h = jnp.maximum(h + b0_ref[...], 0.0)

    # Hidden layers: cast activations to bf16 only for the MXU dot.
    for w_ref, b_ref in ((w1_ref, b1_ref), (w2_ref, b2_ref), (w3_ref, b3_ref)):
        h = jnp.dot(h.astype(jnp.bfloat16), w_ref[...],
                    preferred_element_type=jnp.float32)
        h = jnp.maximum(h + b_ref[...], 0.0)

    # Output layer (128 -> 1): VPU multiply + XLU lane reduction (no N=1 matmul).
    out = jnp.sum(h * w4_ref[...], axis=-1, keepdims=True) + b4_ref[0, 0]
    o_ref[...] = out.astype(o_ref.dtype)


def mlp_forward(x, params):
    """x: (B, 572) float32. params: [(w,b)] with w:(in,out) f32, b:(1,out) f32."""
    (w0, b0), (w1, b1), (w2, b2), (w3, b3), (w4, b4) = params
    B = x.shape[0]

    TB = 1024 if B > 1024 else _round_up(B, 16)   # bf16 sublane multiple
    B_pad = _round_up(B, TB)
    G = B_pad // TB

    # Only the batch dim may need padding (kept f32; the K pad lives in-kernel).
    xk = x if B_pad == B else jnp.pad(x, ((0, B_pad - B), (0, 0)))

    # Small, one-time weight transforms (negligible traffic).
    w0k = jnp.pad(w0.astype(jnp.bfloat16), ((0, K_PAD - IN_DIM), (0, 0)))
    w1k = w1.astype(jnp.bfloat16)
    w2k = w2.astype(jnp.bfloat16)
    w3k = w3.astype(jnp.bfloat16)
    w4k = w4.reshape(1, HID).astype(jnp.float32)     # (128,1) -> (1,128) row
    b4k = b4.reshape(1, 1).astype(jnp.float32)

    def _resident(shape):
        # Same block index on every grid step -> DMA'd once, stays in VMEM.
        n = len(shape)
        return pl.BlockSpec(shape, lambda i, _n=n: (0,) * _n)

    in_specs = [
        pl.BlockSpec((TB, IN_DIM), lambda i: (i, 0)),    # x tile streams over batch
        _resident(w0k.shape), _resident(b0.shape),
        _resident(w1k.shape), _resident(b1.shape),
        _resident(w2k.shape), _resident(b2.shape),
        _resident(w3k.shape), _resident(b3.shape),
        _resident(w4k.shape),
        pl.BlockSpec(memory_space=pltpu.MemorySpace.SMEM),   # (1,1) scalar bias
    ]
    out_specs = pl.BlockSpec((TB, OUT_DIM), lambda i: (i, 0))

    out = pl.pallas_call(
        _mlp_kernel,
        out_shape=jax.ShapeDtypeStruct((B_pad, OUT_DIM), jnp.float32),
        grid=(G,),
        in_specs=in_specs,
        out_specs=out_specs,
        scratch_shapes=[pltpu.VMEM((TB, K_PAD), jnp.bfloat16)],
        compiler_params=pltpu.CompilerParams(
            dimension_semantics=("parallel",),
            vmem_limit_bytes=32 * 1024 * 1024),
    )(xk, w0k, b0, w1k, b1, w2k, b2, w3k, b3, w4k, b4k)

    return out[:B]


def init_params(key):
    """PyTorch nn.Linear default init U(-1/sqrt(in), 1/sqrt(in)).
    Weights stored as (in_features, out_features); biases as (1, out_features)."""
    dims = [(IN_DIM, HID), (HID, HID), (HID, HID), (HID, HID), (HID, OUT_DIM)]
    params = []
    for (din, dout) in dims:
        key, kw, kb = jax.random.split(key, 3)
        bound = 1.0 / jnp.sqrt(jnp.float32(din))
        w = jax.random.uniform(kw, (din, dout), jnp.float32, -bound, bound)
        b = jax.random.uniform(kb, (1, dout), jnp.float32, -bound, bound)
        params.append((w, b))
    return params


def reference_forward_bf16(x, params):
    """Reference with the same precision recipe as the kernel (bf16 dot operands,
    f32 accumulation / bias / ReLU, f32 final layer)."""
    h = x
    for (w, b) in params[:-1]:
        h = jnp.dot(h.astype(jnp.bfloat16), w.astype(jnp.bfloat16),
                    preferred_element_type=jnp.float32)
        h = jnp.maximum(h + b, 0.0)
    w4, b4 = params[-1]
    return jnp.dot(h, w4) + b4


def reference_forward_f32(x, params):
    h = x
    for i, (w, b) in enumerate(params):
        h = h @ w + b
        if i < len(params) - 1:
            h = jnp.maximum(h, 0.0)
    return h


if __name__ == "__main__":
    key = jax.random.PRNGKey(0)
    key, kx = jax.random.split(key)

    B = 8
    x = jax.random.normal(kx, (B, IN_DIM), jnp.float32)
    params = init_params(key)

    # TODO(synk): the PyTorch forward() has a debug print and returns None; the
    # kernel returns the computed output tensor instead.
    fwd = jax.jit(mlp_forward)
    out = jax.block_until_ready(fwd(x, params))

    ref_bf16 = reference_forward_bf16(x, params)
    ref_f32 = reference_forward_f32(x, params)

    assert out.shape == (B, OUT_DIM), out.shape
    assert jnp.allclose(out, ref_bf16, atol=2e-3, rtol=2e-3), "mismatch vs bf16 reference"
    assert jnp.allclose(out, ref_f32, atol=5e-2, rtol=5e-2), "mismatch vs f32 reference"

    print("KERNEL_OK")
</pallas_src>

<mosaic_0001>
module attributes {stable_mosaic.version = 11 : i64} {
  func.func @_mlp_kernel(%arg0: i32, %arg1: memref<16x572xf32, #tpu.memory_space<vmem>>, %arg2: memref<640x128xbf16, #tpu.memory_space<vmem>>, %arg3: memref<1x128xf32, #tpu.memory_space<vmem>>, %arg4: memref<128x128xbf16, #tpu.memory_space<vmem>>, %arg5: memref<1x128xf32, #tpu.memory_space<vmem>>, %arg6: memref<128x128xbf16, #tpu.memory_space<vmem>>, %arg7: memref<1x128xf32, #tpu.memory_space<vmem>>, %arg8: memref<128x128xbf16, #tpu.memory_space<vmem>>, %arg9: memref<1x128xf32, #tpu.memory_space<vmem>>, %arg10: memref<1x128xf32, #tpu.memory_space<vmem>>, %arg11: memref<1x1xf32, #tpu.memory_space<smem>>, %arg12: memref<16x1xf32, #tpu.memory_space<vmem>>, %arg13: memref<16x640xbf16, #tpu.memory_space<vmem>>) attributes {dimension_semantics = [#tpu.dimension_semantics<parallel>], iteration_bounds = array<i64: 1>, scalar_prefetch = 0 : i64, scratch_operands = 1 : i64, tpu.core_type = #tpu.core_type<tc>, window_params = [{transform_indices = @transform_0, window_bounds = array<i64: 16, 572>}, {pipeline_mode = #tpu.pipeline_mode<synchronous>, transform_indices = @transform_1, window_bounds = array<i64: 640, 128>}, {pipeline_mode = #tpu.pipeline_mode<synchronous>, transform_indices = @transform_2, window_bounds = array<i64: 1, 128>}, {pipeline_mode = #tpu.pipeline_mode<synchronous>, transform_indices = @transform_3, window_bounds = array<i64: 128, 128>}, {pipeline_mode = #tpu.pipeline_mode<synchronous>, transform_indices = @transform_4, window_bounds = array<i64: 1, 128>}, {pipeline_mode = #tpu.pipeline_mode<synchronous>, transform_indices = @transform_5, window_bounds = array<i64: 128, 128>}, {pipeline_mode = #tpu.pipeline_mode<synchronous>, transform_indices = @transform_6, window_bounds = array<i64: 1, 128>}, {pipeline_mode = #tpu.pipeline_mode<synchronous>, transform_indices = @transform_7, window_bounds = array<i64: 128, 128>}, {pipeline_mode = #tpu.pipeline_mode<synchronous>, transform_indices = @transform_8, window_bounds = array<i64: 1, 128>}, {pipeline_mode = #tpu.pipeline_mode<synchronous>, transform_indices = @transform_9, window_bounds = array<i64: 1, 128>}, {transform_indices = @transform_10, window_bounds = array<i64: 1, 1>}, {transform_indices = @transform_11, window_bounds = array<i64: 16, 1>}]} {
    %cst = arith.constant 0.000000e+00 : bf16
    %0 = vector.broadcast %cst : bf16 to vector<16x68xbf16>
    %c0 = arith.constant 0 : index
    %c572 = arith.constant 572 : index
    %1 = vector.load %arg13[%c0, %c572] : memref<16x640xbf16, #tpu.memory_space<vmem>>, vector<16x68xbf16>
    tpu.vector_store %arg13[%c0, %c572], %0 {strides = array<i32>} : memref<16x640xbf16, #tpu.memory_space<vmem>>, vector<16x68xbf16>,
    %c0_0 = arith.constant 0 : index
    %c0_1 = arith.constant 0 : index
    %2 = vector.load %arg1[%c0_0, %c0_1] : memref<16x572xf32, #tpu.memory_space<vmem>>, vector<16x572xf32>
    %3 = arith.truncf %2 : vector<16x572xf32> to vector<16x572xbf16>
    %c0_2 = arith.constant 0 : index
    %c0_3 = arith.constant 0 : index
    %4 = vector.load %arg13[%c0_2, %c0_3] : memref<16x640xbf16, #tpu.memory_space<vmem>>, vector<16x572xbf16>
    tpu.vector_store %arg13[%c0_2, %c0_3], %3 {strides = array<i32>} : memref<16x640xbf16, #tpu.memory_space<vmem>>, vector<16x572xbf16>,
    %c0_4 = arith.constant 0 : index
    %c0_5 = arith.constant 0 : index
    %5 = vector.load %arg13[%c0_4, %c0_5] : memref<16x640xbf16, #tpu.memory_space<vmem>>, vector<16x640xbf16>
    %c0_6 = arith.constant 0 : index
    %c0_7 = arith.constant 0 : index
    %6 = vector.load %arg2[%c0_6, %c0_7] : memref<640x128xbf16, #tpu.memory_space<vmem>>, vector<640x128xbf16>
    %cst_8 = arith.constant dense<0.000000e+00> : vector<16x128xf32>
    %7 = tpu.matmul %5, %6, %cst_8 {dimension_numbers = #tpu.dot_dimension_numbers<[1], [0], [0], [1], [0, 0, 1, 1], [], []>} : vector<16x640xbf16>, vector<640x128xbf16>, vector<16x128xf32> -> vector<16x128xf32>
    %c0_9 = arith.constant 0 : index
    %c0_10 = arith.constant 0 : index
    %8 = vector.load %arg3[%c0_9, %c0_10] : memref<1x128xf32, #tpu.memory_space<vmem>>, vector<1x128xf32>
    %9 = vector.broadcast %8 : vector<1x128xf32> to vector<16x128xf32>
    %10 = arith.addf %7, %9 : vector<16x128xf32>
    %cst_11 = arith.constant 0.000000e+00 : f32
    %11 = vector.broadcast %cst_11 : f32 to vector<16x128xf32>
    %12 = arith.maximumf %10, %11 : vector<16x128xf32>
    %13 = arith.truncf %12 : vector<16x128xf32> to vector<16x128xbf16>
    %c0_12 = arith.constant 0 : index
    %c0_13 = arith.constant 0 : index
    %14 = vector.load %arg4[%c0_12, %c0_13] : memref<128x128xbf16, #tpu.memory_space<vmem>>, vector<128x128xbf16>
    %cst_14 = arith.constant dense<0.000000e+00> : vector<16x128xf32>
    %15 = tpu.matmul %13, %14, %cst_14 {dimension_numbers = #tpu.dot_dimension_numbers<[1], [0], [0], [1], [0, 0, 1, 1], [], []>} : vector<16x128xbf16>, vector<128x128xbf16>, vector<16x128xf32> -> vector<16x128xf32>
    %c0_15 = arith.constant 0 : index
    %c0_16 = arith.constant 0 : index
    %16 = vector.load %arg5[%c0_15, %c0_16] : memref<1x128xf32, #tpu.memory_space<vmem>>, vector<1x128xf32>
    %17 = vector.broadcast %16 : vector<1x128xf32> to vector<16x128xf32>
    %18 = arith.addf %15, %17 : vector<16x128xf32>
    %cst_17 = arith.constant 0.000000e+00 : f32
    %19 = vector.broadcast %cst_17 : f32 to vector<16x128xf32>
    %20 = arith.maximumf %18, %19 : vector<16x128xf32>
    %21 = arith.truncf %20 : vector<16x128xf32> to vector<16x128xbf16>
    %c0_18 = arith.constant 0 : index
    %c0_19 = arith.constant 0 : index
    %22 = vector.load %arg6[%c0_18, %c0_19] : memref<128x128xbf16, #tpu.memory_space<vmem>>, vector<128x128xbf16>
    %cst_20 = arith.constant dense<0.000000e+00> : vector<16x128xf32>
    %23 = tpu.matmul %21, %22, %cst_20 {dimension_numbers = #tpu.dot_dimension_numbers<[1], [0], [0], [1], [0, 0, 1, 1], [], []>} : vector<16x128xbf16>, vector<128x128xbf16>, vector<16x128xf32> -> vector<16x128xf32>
    %c0_21 = arith.constant 0 : index
    %c0_22 = arith.constant 0 : index
    %24 = vector.load %arg7[%c0_21, %c0_22] : memref<1x128xf32, #tpu.memory_space<vmem>>, vector<1x128xf32>
    %25 = vector.broadcast %24 : vector<1x128xf32> to vector<16x128xf32>
    %26 = arith.addf %23, %25 : vector<16x128xf32>
    %cst_23 = arith.constant 0.000000e+00 : f32
    %27 = vector.broadcast %cst_23 : f32 to vector<16x128xf32>
    %28 = arith.maximumf %26, %27 : vector<16x128xf32>
    %29 = arith.truncf %28 : vector<16x128xf32> to vector<16x128xbf16>
    %c0_24 = arith.constant 0 : index
    %c0_25 = arith.constant 0 : index
    %30 = vector.load %arg8[%c0_24, %c0_25] : memref<128x128xbf16, #tpu.memory_space<vmem>>, vector<128x128xbf16>
    %cst_26 = arith.constant dense<0.000000e+00> : vector<16x128xf32>
    %31 = tpu.matmul %29, %30, %cst_26 {dimension_numbers = #tpu.dot_dimension_numbers<[1], [0], [0], [1], [0, 0, 1, 1], [], []>} : vector<16x128xbf16>, vector<128x128xbf16>, vector<16x128xf32> -> vector<16x128xf32>
    %c0_27 = arith.constant 0 : index
    %c0_28 = arith.constant 0 : index
    %32 = vector.load %arg9[%c0_27, %c0_28] : memref<1x128xf32, #tpu.memory_space<vmem>>, vector<1x128xf32>
    %33 = vector.broadcast %32 : vector<1x128xf32> to vector<16x128xf32>
    %34 = arith.addf %31, %33 : vector<16x128xf32>
    %cst_29 = arith.constant 0.000000e+00 : f32
    %35 = vector.broadcast %cst_29 : f32 to vector<16x128xf32>
    %36 = arith.maximumf %34, %35 : vector<16x128xf32>
    %c0_30 = arith.constant 0 : index
    %c0_31 = arith.constant 0 : index
    %37 = vector.load %arg10[%c0_30, %c0_31] : memref<1x128xf32, #tpu.memory_space<vmem>>, vector<1x128xf32>
    %38 = vector.broadcast %37 : vector<1x128xf32> to vector<16x128xf32>
    %39 = arith.mulf %36, %38 : vector<16x128xf32>
    %cst_32 = arith.constant dense<0.000000e+00> : vector<16xf32>
    %40 = vector.multi_reduction <add>, %39, %cst_32 [1] : vector<16x128xf32> to vector<16xf32>
    %41 = vector.shape_cast %40 : vector<16xf32> to vector<16x1xf32>
    %c0_33 = arith.constant 0 : index
    %c0_34 = arith.constant 0 : index
    %42 = memref.load %arg11[%c0_33, %c0_34] : memref<1x1xf32, #tpu.memory_space<smem>>
    %43 = vector.broadcast %42 : f32 to vector<16x1xf32>
    %44 = arith.addf %41, %43 : vector<16x1xf32>
    %c0_35 = arith.constant 0 : index
    %c0_36 = arith.constant 0 : index
    %45 = vector.load %arg12[%c0_35, %c0_36] : memref<16x1xf32, #tpu.memory_space<vmem>>, vector<16x1xf32>
    tpu.vector_store %arg12[%c0_35, %c0_36], %44 {strides = array<i32>} : memref<16x1xf32, #tpu.memory_space<vmem>>, vector<16x1xf32>,
    return
  }
  func.func @transform_0(%arg0: i32) -> (i32, i32) {
    %c0_i32 = arith.constant 0 : i32
    %c0_i32_0 = arith.constant 0 : i32
    return %arg0, %c0_i32 : i32, i32
  }
  func.func @transform_1(%arg0: i32) -> (i32, i32) {
    %c0_i32 = arith.constant 0 : i32
    %c0_i32_0 = arith.constant 0 : i32
    %c0_i32_1 = arith.constant 0 : i32
    return %c0_i32, %c0_i32_0 : i32, i32
  }
  func.func @transform_2(%arg0: i32) -> (i32, i32) {
    %c0_i32 = arith.constant 0 : i32
    %c0_i32_0 = arith.constant 0 : i32
    %c0_i32_1 = arith.constant 0 : i32
    return %c0_i32, %c0_i32_0 : i32, i32
  }
  func.func @transform_3(%arg0: i32) -> (i32, i32) {
    %c0_i32 = arith.constant 0 : i32
    %c0_i32_0 = arith.constant 0 : i32
    %c0_i32_1 = arith.constant 0 : i32
    return %c0_i32, %c0_i32_0 : i32, i32
  }
  func.func @transform_4(%arg0: i32) -> (i32, i32) {
    %c0_i32 = arith.constant 0 : i32
    %c0_i32_0 = arith.constant 0 : i32
    %c0_i32_1 = arith.constant 0 : i32
    return %c0_i32, %c0_i32_0 : i32, i32
  }
  func.func @transform_5(%arg0: i32) -> (i32, i32) {
    %c0_i32 = arith.constant 0 : i32
    %c0_i32_0 = arith.constant 0 : i32
    %c0_i32_1 = arith.constant 0 : i32
    return %c0_i32, %c0_i32_0 : i32, i32
  }
  func.func @transform_6(%arg0: i32) -> (i32, i32) {
    %c0_i32 = arith.constant 0 : i32
    %c0_i32_0 = arith.constant 0 : i32
    %c0_i32_1 = arith.constant 0 : i32
    return %c0_i32, %c0_i32_0 : i32, i32
  }
  func.func @transform_7(%arg0: i32) -> (i32, i32) {
    %c0_i32 = arith.constant 0 : i32
    %c0_i32_0 = arith.constant 0 : i32
    %c0_i32_1 = arith.constant 0 : i32
    return %c0_i32, %c0_i32_0 : i32, i32
  }
  func.func @transform_8(%arg0: i32) -> (i32, i32) {
    %c0_i32 = arith.constant 0 : i32
    %c0_i32_0 = arith.constant 0 : i32
    %c0_i32_1 = arith.constant 0 : i32
    return %c0_i32, %c0_i32_0 : i32, i32
  }
  func.func @transform_9(%arg0: i32) -> (i32, i32) {
    %c0_i32 = arith.constant 0 : i32
    %c0_i32_0 = arith.constant 0 : i32
    %c0_i32_1 = arith.constant 0 : i32
    return %c0_i32, %c0_i32_0 : i32, i32
  }
  func.func @transform_10(%arg0: i32) -> (i32, i32) {
    %c0_i32 = arith.constant 0 : i32
    %c0_i32_0 = arith.constant 0 : i32
    %c0_i32_1 = arith.constant 0 : i32
    return %c0_i32, %c0_i32_0 : i32, i32
  }
  func.func @transform_11(%arg0: i32) -> (i32, i32) {
    %c0_i32 = arith.constant 0 : i32
    %c0_i32_0 = arith.constant 0 : i32
    return %arg0, %c0_i32 : i32, i32
  }
}

</mosaic_0001>

<llo_original>
// kernel: mlp_forward.1
$region0: #{mlp_forward.1}
  #allocation0 [shape = 'u32[]', space=smem, size = 0x4, offset = 0x4, fixed_abs, tag = 'smem constant byte address 0x4 - core index']
  #allocation1 [shape = 'u32[144,128]{1,0:T(1,128)}', space=vmem, size = 0x12000, scoped, tag = 'internal scratch']
  #allocation2 [shape = 'bf16[16,640]{1,0:T(16,128)(2,1)}', space=vmem, size = 0x5000, scoped, tag = 'scratch operand']
  #allocation3 [shape = 'f32[1,1]{1,0:T(1,128)S(6)}', space=smem, size = 0x200, scoped, tag = 'scoped memory for mlp_forward.1']
  %s0 = inlined_call_operand.vmem [shape: f32[16,572], index: 0, kind: input, shape index: {}]
  %s1 = inlined_call_operand.vmem [shape: bf16[640,128], index: 1, kind: input, shape index: {}]
  %s2 = inlined_call_operand.vmem [shape: f32[1,128], index: 2, kind: input, shape index: {}]
  %s3 = inlined_call_operand.vmem [shape: bf16[128,128], index: 3, kind: input, shape index: {}]
  %s4 = inlined_call_operand.vmem [shape: f32[1,128], index: 4, kind: input, shape index: {}]
  %s5 = inlined_call_operand.vmem [shape: bf16[128,128], index: 5, kind: input, shape index: {}]
  %s6 = inlined_call_operand.vmem [shape: f32[1,128], index: 6, kind: input, shape index: {}]
  %s7 = inlined_call_operand.vmem [shape: bf16[128,128], index: 7, kind: input, shape index: {}]
  %s8 = inlined_call_operand.vmem [shape: f32[1,128], index: 8, kind: input, shape index: {}]
  %s9 = inlined_call_operand.vmem [shape: f32[1,128], index: 9, kind: input, shape index: {}]
  %s10 = inlined_call_operand.<no memory space> [shape: f32[1,1], index: 10, kind: input, shape index: {}]
  %s11 = inlined_call_operand.vmem [shape: f32[16,1], index: 11, kind: output, shape index: {}]
  %s12 = sld [smem:[#allocation0]]
  $region54: #{mlp_forward.1} parent=0
    _
  %s14 = ssub.s32 1, %s12
  %s15 = scalar_select 0, %s14, %s12
  %16 = sst [smem:[#allocation3]] %s10
  // Predicated region
  $region2: #{mlp_forward.1} parent=0 // pred_check
    _
  $region3: #{mlp_forward.1} parent=0 // pred_check_branch
    %18 = sbr.rel (0) target = $region5
  $region4: #{mlp_forward.1} parent=0 // pred_region
    _
  $region5: #{mlp_forward.1} parent=0 // pred_fallthru
    _
  // Predicated region
  $region6: #{mlp_forward.1} parent=0 // pred_check
    _
  $region7: #{mlp_forward.1} parent=0 // pred_check_branch
    %20 = sbr.rel (0) target = $region9
  $region8: #{mlp_forward.1} parent=0 // pred_region
    _
  $region9: #{mlp_forward.1} parent=0 // pred_fallthru
    _
  // Predicated region
  $region10: #{mlp_forward.1} parent=0 // pred_check
    _
  $region11: #{mlp_forward.1} parent=0 // pred_check_branch
    %22 = sbr.rel (0) target = $region13
  $region12: #{mlp_forward.1} parent=0 // pred_region
    _
  $region13: #{mlp_forward.1} parent=0 // pred_fallthru
    _
  // Predicated region
  $region14: #{mlp_forward.1} parent=0 // pred_check
    _
  $region15: #{mlp_forward.1} parent=0 // pred_check_branch
    %24 = sbr.rel (0) target = $region17
  $region16: #{mlp_forward.1} parent=0 // pred_region
    _
  $region17: #{mlp_forward.1} parent=0 // pred_fallthru
    _
  // Predicated region
  $region18: #{mlp_forward.1} parent=0 // pred_check
    _
  $region19: #{mlp_forward.1} parent=0 // pred_check_branch
    %26 = sbr.rel (0) target = $region21
  $region20: #{mlp_forward.1} parent=0 // pred_region
    _
  $region21: #{mlp_forward.1} parent=0 // pred_fallthru
    _
  // Predicated region
  $region22: #{mlp_forward.1} parent=0 // pred_check
    _
  $region23: #{mlp_forward.1} parent=0 // pred_check_branch
    %28 = sbr.rel (0) target = $region25
  $region24: #{mlp_forward.1} parent=0 // pred_region
    _
  $region25: #{mlp_forward.1} parent=0 // pred_fallthru
    _
  // Predicated region
  $region26: #{mlp_forward.1} parent=0 // pred_check
    _
  $region27: #{mlp_forward.1} parent=0 // pred_check_branch
    %30 = sbr.rel (0) target = $region29
  $region28: #{mlp_forward.1} parent=0 // pred_region
    _
  $region29: #{mlp_forward.1} parent=0 // pred_fallthru
    _
  // Predicated region
  $region30: #{mlp_forward.1} parent=0 // pred_check
    _
  $region31: #{mlp_forward.1} parent=0 // pred_check_branch
    %32 = sbr.rel (0) target = $region33
  $region32: #{mlp_forward.1} parent=0 // pred_region
    _
  $region33: #{mlp_forward.1} parent=0 // pred_fallthru
    _
  // Predicated region
  $region34: #{mlp_forward.1} parent=0 // pred_check
    _
  $region35: #{mlp_forward.1} parent=0 // pred_check_branch
    %34 = sbr.rel (0) target = $region37
  $region36: #{mlp_forward.1} parent=0 // pred_region
    _
  $region37: #{mlp_forward.1} parent=0 // pred_fallthru
    _
  // Predicated region
  $region38: #{mlp_forward.1} parent=0 // pred_check
    _
  $region39: #{mlp_forward.1} parent=0 // pred_check_branch
    %36 = sbr.rel (0) target = $region41
  $region40: #{mlp_forward.1} parent=0 // pred_region
    _
  $region41: #{mlp_forward.1} parent=0 // pred_fallthru
    _
  // Predicated region
  $region42: #{mlp_forward.1} parent=0 // pred_check
    _
  $region43: #{mlp_forward.1} parent=0 // pred_check_branch
    %38 = sbr.rel (0) target = $region45
  $region44: #{mlp_forward.1} parent=0 // pred_region
    _
  $region45: #{mlp_forward.1} parent=0 // pred_fallthru
    _
  %vm40 = vcmask 1048032
  %41 = vst.msk [vmem:[#allocation2 + $0x20] sm:$0xff] %vm40, 0
  %v42 = vld [vmem:[%s0] sm:$0xff]
  %v43 = vld [vmem:[%s0 + $0x8] sm:$0xff]
  %v44 = vld [vmem:[%s0 + $0x10] sm:$0xff]
  %v45 = vld [vmem:[%s0 + $0x18] sm:$0xff]
  %v46 = vld [vmem:[%s0 + $0x20] sm:$0xff]
  %v47 = vld [vmem:[%s0 + $0x28] sm:$0xff]
  %v48 = vld [vmem:[%s0 + $0x30] sm:$0xff]
  %v49 = vld [vmem:[%s0 + $0x38] sm:$0xff]
  %v50 = vld [vmem:[%s0 + $0x40] sm:$0xff]
  %v51 = vld [vmem:[%s0 + $0x48] sm:$0xff]
  %v52 = vpack.c.bf16 %v47, %v42
  %v53 = vpack.c.bf16 %v48, %v43
  %v54 = vpack.c.bf16 %v49, %v44
  %v55 = vpack.c.bf16 %v50, %v45
  %v56 = vpack.c.bf16 %v51, %v46
  %57 = vst [vmem:[#allocation2] sm:$0xff] %v52
  %58 = vst [vmem:[#allocation2 + $0x8] sm:$0xff] %v53
  %59 = vst [vmem:[#allocation2 + $0x10] sm:$0xff] %v54
  %60 = vst [vmem:[#allocation2 + $0x18] sm:$0xff] %v55
  %vm61 = vcmask 490496
  %62 = vst.msk [vmem:[#allocation2 + $0x20] sm:$0xff] %vm61, %v56
  %v63 = vld [vmem:[#allocation2] sm:$0xff]
  %v64 = vld [vmem:[#allocation2 + $0x8] sm:$0xff]
  %v65 = vld [vmem:[#allocation2 + $0x10] sm:$0xff]
  %v66 = vld [vmem:[#allocation2 + $0x18] sm:$0xff]
  %v67 = vld [vmem:[#allocation2 + $0x20] sm:$0xff]
  %v68 = vld [vmem:[%s1] sm:$0xf]
  %v69 = vld [vmem:[%s1 + $0x4] sm:$0xf]
  %v70 = vld [vmem:[%s1 + $0x8] sm:$0xf]
  %v71 = vld [vmem:[%s1 + $0xc] sm:$0xf]
  %v72 = vld [vmem:[%s1 + $0x10] sm:$0xf]
  %v73 = vld [vmem:[%s1 + $0x14] sm:$0xf]
  %v74 = vld [vmem:[%s1 + $0x18] sm:$0xf]
  %v75 = vld [vmem:[%s1 + $0x1c] sm:$0xf]
  %v76 = vld [vmem:[%s1 + $0x20] sm:$0xf]
  %v77 = vld [vmem:[%s1 + $0x24] sm:$0xf]
  %v78 = vld [vmem:[%s1 + $0x28] sm:$0xf]
  %v79 = vld [vmem:[%s1 + $0x2c] sm:$0xf]
  %v80 = vld [vmem:[%s1 + $0x30] sm:$0xf]
  %v81 = vld [vmem:[%s1 + $0x34] sm:$0xf]
  %v82 = vld [vmem:[%s1 + $0x38] sm:$0xf]
  %v83 = vld [vmem:[%s1 + $0x3c] sm:$0xf]
  %v84 = vld [vmem:[%s1 + $0x40] sm:$0xf]
  %v85 = vld [vmem:[%s1 + $0x44] sm:$0xf]
  %v86 = vld [vmem:[%s1 + $0x48] sm:$0xf]
  %v87 = vld [vmem:[%s1 + $0x4c] sm:$0xf]
  %v88 = vld [vmem:[%s1 + $0x50] sm:$0xf]
  %v89 = vld [vmem:[%s1 + $0x54] sm:$0xf]
  %v90 = vld [vmem:[%s1 + $0x58] sm:$0xf]
  %v91 = vld [vmem:[%s1 + $0x5c] sm:$0xf]
  %v92 = vld [vmem:[%s1 + $0x60] sm:$0xf]
  %v93 = vld [vmem:[%s1 + $0x64] sm:$0xf]
  %v94 = vld [vmem:[%s1 + $0x68] sm:$0xf]
  %v95 = vld [vmem:[%s1 + $0x6c] sm:$0xf]
  %v96 = vld [vmem:[%s1 + $0x70] sm:$0xf]
  %v97 = vld [vmem:[%s1 + $0x74] sm:$0xf]
  %v98 = vld [vmem:[%s1 + $0x78] sm:$0xf]
  %v99 = vld [vmem:[%s1 + $0x7c] sm:$0xf]
  %v100 = vld [vmem:[%s1 + $0x80] sm:$0xf]
  %v101 = vld [vmem:[%s1 + $0x84] sm:$0xf]
  %v102 = vld [vmem:[%s1 + $0x88] sm:$0xf]
  %v103 = vld [vmem:[%s1 + $0x8c] sm:$0xf]
  %v104 = vld [vmem:[%s1 + $0x90] sm:$0xf]
  %v105 = vld [vmem:[%s1 + $0x94] sm:$0xf]
  %v106 = vld [vmem:[%s1 + $0x98] sm:$0xf]
  %v107 = vld [vmem:[%s1 + $0x9c] sm:$0xf]
  %v108 = vld [vmem:[%s1 + $0xa0] sm:$0xf]
  %v109 = vld [vmem:[%s1 + $0xa4] sm:$0xf]
  %v110 = vld [vmem:[%s1 + $0xa8] sm:$0xf]
  %v111 = vld [vmem:[%s1 + $0xac] sm:$0xf]
  %v112 = vld [vmem:[%s1 + $0xb0] sm:$0xf]
  %v113 = vld [vmem:[%s1 + $0xb4] sm:$0xf]
  %v114 = vld [vmem:[%s1 + $0xb8] sm:$0xf]
  %v115 = vld [vmem:[%s1 + $0xbc] sm:$0xf]
  %v116 = vld [vmem:[%s1 + $0xc0] sm:$0xf]
  %v117 = vld [vmem:[%s1 + $0xc4] sm:$0xf]
  %v118 = vld [vmem:[%s1 + $0xc8] sm:$0xf]
  %v119 = vld [vmem:[%s1 + $0xcc] sm:$0xf]
  %v120 = vld [vmem:[%s1 + $0xd0] sm:$0xf]
  %v121 = vld [vmem:[%s1 + $0xd4] sm:$0xf]
  %v122 = vld [vmem:[%s1 + $0xd8] sm:$0xf]
  %v123 = vld [vmem:[%s1 + $0xdc] sm:$0xf]
  %v124 = vld [vmem:[%s1 + $0xe0] sm:$0xf]
  %v125 = vld [vmem:[%s1 + $0xe4] sm:$0xf]
  %v126 = vld [vmem:[%s1 + $0xe8] sm:$0xf]
  %v127 = vld [vmem:[%s1 + $0xec] sm:$0xf]
  %v128 = vld [vmem:[%s1 + $0xf0] sm:$0xf]
  %v129 = vld [vmem:[%s1 + $0xf4] sm:$0xf]
  %v130 = vld [vmem:[%s1 + $0xf8] sm:$0xf]
  %v131 = vld [vmem:[%s1 + $0xfc] sm:$0xf]
  %v132 = vld [vmem:[%s1 + $0x100] sm:$0xf]
  %v133 = vld [vmem:[%s1 + $0x104] sm:$0xf]
  %v134 = vld [vmem:[%s1 + $0x108] sm:$0xf]
  %v135 = vld [vmem:[%s1 + $0x10c] sm:$0xf]
  %v136 = vld [vmem:[%s1 + $0x110] sm:$0xf]
  %v137 = vld [vmem:[%s1 + $0x114] sm:$0xf]
  %v138 = vld [vmem:[%s1 + $0x118] sm:$0xf]
  %v139 = vld [vmem:[%s1 + $0x11c] sm:$0xf]
  %v140 = vld [vmem:[%s1 + $0x120] sm:$0xf]
  %v141 = vld [vmem:[%s1 + $0x124] sm:$0xf]
  %v142 = vld [vmem:[%s1 + $0x128] sm:$0xf]
  %v143 = vld [vmem:[%s1 + $0x12c] sm:$0xf]
  %v144 = vld [vmem:[%s1 + $0x130] sm:$0xf]
  %v145 = vld [vmem:[%s1 + $0x134] sm:$0xf]
  %v146 = vld [vmem:[%s1 + $0x138] sm:$0xf]
  %v147 = vld [vmem:[%s1 + $0x13c] sm:$0xf]
  %v148 = vld [vmem:[%s2] sm:$0x1]
  %v150 = vlaneseq
  %v151 = vshrl.u32 %v150, 7
  %v152 = vsub.s32 0, %v151
  %v153 = vrot.slane %v148, %v152
  %v235 = vunpack.c.l.b16 %v68
  %v236 = vunpack.c.l.b16 %v69
  %v237 = vunpack.c.l.b16 %v70
  %v238 = vunpack.c.l.b16 %v71
  %v239 = vunpack.c.l.b16 %v72
  %v240 = vunpack.c.l.b16 %v73
  %v241 = vunpack.c.l.b16 %v74
  %v242 = vunpack.c.l.b16 %v75
  %v243 = vunpack.c.l.b16 %v76
  %v244 = vunpack.c.l.b16 %v77
  %v245 = vunpack.c.l.b16 %v78
  %v246 = vunpack.c.l.b16 %v79
  %v247 = vunpack.c.l.b16 %v80
  %v248 = vunpack.c.l.b16 %v81
  %v249 = vunpack.c.l.b16 %v82
  %v250 = vunpack.c.l.b16 %v83
  %v251 = vunpack.c.l.b16 %v84
  %v252 = vunpack.c.l.b16 %v85
  %v253 = vunpack.c.l.b16 %v86
  %v254 = vunpack.c.l.b16 %v87
  %v255 = vunpack.c.l.b16 %v88
  %v256 = vunpack.c.l.b16 %v89
  %v257 = vunpack.c.l.b16 %v90
  %v258 = vunpack.c.l.b16 %v91
  %v259 = vunpack.c.l.b16 %v92
  %v260 = vunpack.c.l.b16 %v93
  %v261 = vunpack.c.l.b16 %v94
  %v262 = vunpack.c.l.b16 %v95
  %v263 = vunpack.c.l.b16 %v96
  %v264 = vunpack.c.l.b16 %v97
  %v265 = vunpack.c.l.b16 %v98
  %v266 = vunpack.c.l.b16 %v99
  %v267 = vunpack.c.l.b16 %v100
  %v268 = vunpack.c.l.b16 %v101
  %v269 = vunpack.c.l.b16 %v102
  %v270 = vunpack.c.l.b16 %v103
  %v271 = vunpack.c.l.b16 %v104
  %v272 = vunpack.c.l.b16 %v105
  %v273 = vunpack.c.l.b16 %v106
  %v274 = vunpack.c.l.b16 %v107
  %v275 = vunpack.c.l.b16 %v108
  %v276 = vunpack.c.l.b16 %v109
  %v277 = vunpack.c.l.b16 %v110
  %v278 = vunpack.c.l.b16 %v111
  %v279 = vunpack.c.l.b16 %v112
  %v280 = vunpack.c.l.b16 %v113
  %v281 = vunpack.c.l.b16 %v114
  %v282 = vunpack.c.l.b16 %v115
  %v283 = vunpack.c.l.b16 %v116
  %v284 = vunpack.c.l.b16 %v117
  %v285 = vunpack.c.l.b16 %v118
  %v286 = vunpack.c.l.b16 %v119
  %v287 = vunpack.c.l.b16 %v120
  %v288 = vunpack.c.l.b16 %v121
  %v289 = vunpack.c.l.b16 %v122
  %v290 = vunpack.c.l.b16 %v123
  %v291 = vunpack.c.l.b16 %v124
  %v292 = vunpack.c.l.b16 %v125
  %v293 = vunpack.c.l.b16 %v126
  %v294 = vunpack.c.l.b16 %v127
  %v295 = vunpack.c.l.b16 %v128
  %v296 = vunpack.c.l.b16 %v129
  %v297 = vunpack.c.l.b16 %v130
  %v298 = vunpack.c.l.b16 %v131
  %v299 = vunpack.c.l.b16 %v132
  %v300 = vunpack.c.l.b16 %v133
  %v301 = vunpack.c.l.b16 %v134
  %v302 = vunpack.c.l.b16 %v135
  %v303 = vunpack.c.l.b16 %v136
  %v304 = vunpack.c.l.b16 %v137
  %v305 = vunpack.c.l.b16 %v138
  %v306 = vunpack.c.l.b16 %v139
  %v307 = vunpack.c.l.b16 %v140
  %v308 = vunpack.c.l.b16 %v141
  %v309 = vunpack.c.l.b16 %v142
  %v310 = vunpack.c.l.b16 %v143
  %v311 = vunpack.c.l.b16 %v144
  %v312 = vunpack.c.l.b16 %v145
  %v313 = vunpack.c.l.b16 %v146
  %v314 = vunpack.c.l.b16 %v147
  %v315 = vpack.c.b16 %v236, %v235
  %v316 = vpack.c.b16 %v238, %v237
  %v317 = vpack.c.b16 %v240, %v239
  %v318 = vpack.c.b16 %v242, %v241
  %v319 = vpack.c.b16 %v244, %v243
  %v320 = vpack.c.b16 %v246, %v245
  %v321 = vpack.c.b16 %v248, %v247
  %v322 = vpack.c.b16 %v250, %v249
  %v323 = vpack.c.b16 %v252, %v251
  %v324 = vpack.c.b16 %v254, %v253
  %v325 = vpack.c.b16 %v256, %v255
  %v326 = vpack.c.b16 %v258, %v257
  %v327 = vpack.c.b16 %v260, %v259
  %v328 = vpack.c.b16 %v262, %v261
  %v329 = vpack.c.b16 %v264, %v263
  %v330 = vpack.c.b16 %v266, %v265
  %v331 = vpack.c.b16 %v268, %v267
  %v332 = vpack.c.b16 %v270, %v269
  %v333 = vpack.c.b16 %v272, %v271
  %v334 = vpack.c.b16 %v274, %v273
  %v335 = vpack.c.b16 %v276, %v275
  %v336 = vpack.c.b16 %v278, %v277
  %v337 = vpack.c.b16 %v280, %v279
  %v338 = vpack.c.b16 %v282, %v281
  %v339 = vpack.c.b16 %v284, %v283
  %v340 = vpack.c.b16 %v286, %v285
  %v341 = vpack.c.b16 %v288, %v287
  %v342 = vpack.c.b16 %v290, %v289
  %v343 = vpack.c.b16 %v292, %v291
  %v344 = vpack.c.b16 %v294, %v293
  %v345 = vpack.c.b16 %v296, %v295
  %v346 = vpack.c.b16 %v298, %v297
  %v347 = vpack.c.b16 %v300, %v299
  %v348 = vpack.c.b16 %v302, %v301
  %v349 = vpack.c.b16 %v304, %v303
  %v350 = vpack.c.b16 %v306, %v305
  %v351 = vpack.c.b16 %v308, %v307
  %v352 = vpack.c.b16 %v310, %v309
  %v353 = vpack.c.b16 %v312, %v311
  %v354 = vpack.c.b16 %v314, %v313
  %395 = vmatprep.subr.bf16.mxu0 0
  %396 = vmatpush1.bf16.msra.mxu0 %v315
  %397 = vmatprep.subr.bf16.mxu0 0
  %398 = vmatpush1.bf16.msra.mxu0 %v316
  %399 = vmatprep.subr.bf16.mxu0 0
  %400 = vmatpush1.bf16.msra.mxu0 %v317
  %401 = vmatprep.subr.bf16.mxu0 0
  %402 = vmatpush1.bf16.msra.mxu0 %v318
  %403 = vmatprep.subr.bf16.mxu0 0
  %404 = vmatpush1.bf16.msra.mxu0 %v319
  %405 = vmatprep.subr.bf16.mxu0 0
  %406 = vmatpush1.bf16.msra.mxu0 %v320
  %407 = vmatprep.subr.bf16.mxu0 0
  %408 = vmatpush1.bf16.msra.mxu0 %v321
  %409 = vmatprep.subr.bf16.mxu0 0
  %410 = vmatpush1.bf16.msra.mxu0 %v322
  %411 = vmatprep.subr.bf16.mxu0 0
  %412 = vmatpush1.bf16.msra.mxu0 %v323
  %413 = vmatprep.subr.bf16.mxu0 0
  %414 = vmatpush1.bf16.msra.mxu0 %v324
  %415 = vmatprep.subr.bf16.mxu0 0
  %416 = vmatpush1.bf16.msra.mxu0 %v325
  %417 = vmatprep.subr.bf16.mxu0 0
  %418 = vmatpush1.bf16.msra.mxu0 %v326
  %419 = vmatprep.subr.bf16.mxu0 0
  %420 = vmatpush1.bf16.msra.mxu0 %v327
  %421 = vmatprep.subr.bf16.mxu0 0
  %422 = vmatpush1.bf16.msra.mxu0 %v328
  %423 = vmatprep.subr.bf16.mxu0 0
  %424 = vmatpush1.bf16.msra.mxu0 %v329
  %425 = vmatprep.subr.bf16.mxu0 0
  %426 = vmatpush1.bf16.msra.mxu0 %v330
  %427 = vmatprep.mubr.bf16.mxu0 %v64
  %428 = vmatmul.mubr.bf16.gmra.mrb[0].mxu0 %v63
  %v429 = vpop.f32.mrb[0].mxu0
  %v430 = vadd.f32 %v153, %v429
  %v431 = vpop.f32.mrb[0].mxu0
  %v432 = vpop.f32.mrb[0].mxu0
  %v433 = vadd.f32 %v153, %v432
  %v434 = vpop.f32.mrb[0].mxu0
  %435 = vdwg.mxu0
  %436 = vmatprep.subr.bf16.mxu0 0
  %437 = vmatpush1.bf16.msra.mxu0 %v331
  %438 = vmatprep.subr.bf16.mxu0 0
  %439 = vmatpush1.bf16.msra.mxu0 %v332
  %440 = vmatprep.subr.bf16.mxu0 0
  %441 = vmatpush1.bf16.msra.mxu0 %v333
  %442 = vmatprep.subr.bf16.mxu0 0
  %443 = vmatpush1.bf16.msra.mxu0 %v334
  %444 = vmatprep.subr.bf16.mxu0 0
  %445 = vmatpush1.bf16.msra.mxu0 %v335
  %446 = vmatprep.subr.bf16.mxu0 0
  %447 = vmatpush1.bf16.msra.mxu0 %v336
  %448 = vmatprep.subr.bf16.mxu0 0
  %449 = vmatpush1.bf16.msra.mxu0 %v337
  %450 = vmatprep.subr.bf16.mxu0 0
  %451 = vmatpush1.bf16.msra.mxu0 %v338
  %452 = vmatprep.subr.bf16.mxu0 0
  %453 = vmatpush1.bf16.msra.mxu0 %v339
  %454 = vmatprep.subr.bf16.mxu0 0
  %455 = vmatpush1.bf16.msra.mxu0 %v340
  %456 = vmatprep.subr.bf16.mxu0 0
  %457 = vmatpush1.bf16.msra.mxu0 %v341
  %458 = vmatprep.subr.bf16.mxu0 0
  %459 = vmatpush1.bf16.msra.mxu0 %v342
  %460 = vmatprep.subr.bf16.mxu0 0
  %461 = vmatpush1.bf16.msra.mxu0 %v343
  %462 = vmatprep.subr.bf16.mxu0 0
  %463 = vmatpush1.bf16.msra.mxu0 %v344
  %464 = vmatprep.subr.bf16.mxu0 0
  %465 = vmatpush1.bf16.msra.mxu0 %v345
  %466 = vmatprep.subr.bf16.mxu0 0
  %467 = vmatpush1.bf16.msra.mxu0 %v346
  %468 = vmatprep.mubr.bf16.mxu0 %v66
  %469 = vmatmul.mubr.bf16.gmra.mrb[0].mxu0 %v65
  %v470 = vpop.f32.mrb[0].mxu0
  %v471 = vadd.f32 %v430, %v470
  %v472 = vpop.f32.mrb[0].mxu0
  %v473 = vpop.f32.mrb[0].mxu0
  %v474 = vadd.f32 %v433, %v473
  %v475 = vpop.f32.mrb[0].mxu0
  %476 = vdwg.mxu0
  %477 = vmatprep.subr.bf16.mxu0 0
  %478 = vmatpush1.bf16.msra.mxu0 %v347
  %479 = vmatprep.subr.bf16.mxu0 0
  %480 = vmatpush1.bf16.msra.mxu0 %v348
  %481 = vmatprep.subr.bf16.mxu0 0
  %482 = vmatpush1.bf16.msra.mxu0 %v349
  %483 = vmatprep.subr.bf16.mxu0 0
  %484 = vmatpush1.bf16.msra.mxu0 %v350
  %485 = vmatprep.subr.bf16.mxu0 0
  %486 = vmatpush1.bf16.msra.mxu0 %v351
  %487 = vmatprep.subr.bf16.mxu0 0
  %488 = vmatpush1.bf16.msra.mxu0 %v352
  %489 = vmatprep.subr.bf16.mxu0 0
  %490 = vmatpush1.bf16.msra.mxu0 %v353
  %491 = vmatprep.subr.bf16.mxu0 0
  %492 = vmatpush1.bf16.msra.mxu0 %v354
  %493 = vmatprep.subr.bf16.mxu0 0
  %494 = vmatpush1.bf16.msra.mxu0 0
  %495 = vmatprep.subr.bf16.mxu0 0
  %496 = vmatpush1.bf16.msra.mxu0 0
  %497 = vmatprep.subr.bf16.mxu0 0
  %498 = vmatpush1.bf16.msra.mxu0 0
  %499 = vmatprep.subr.bf16.mxu0 0
  %500 = vmatpush1.bf16.msra.mxu0 0
  %501 = vmatprep.subr.bf16.mxu0 0
  %502 = vmatpush1.bf16.msra.mxu0 0
  %503 = vmatprep.subr.bf16.mxu0 0
  %504 = vmatpush1.bf16.msra.mxu0 0
  %505 = vmatprep.subr.bf16.mxu0 0
  %506 = vmatpush1.bf16.msra.mxu0 0
  %507 = vmatprep.subr.bf16.mxu0 0
  %508 = vmatpush1.bf16.msra.mxu0 0
  %509 = vmatprep.mubr.bf16.mxu0 0
  %510 = vmatmul.mubr.bf16.gmra.mrb[0].mxu0 %v67
  %v511 = vpop.f32.mrb[0].mxu0
  %v512 = vadd.f32 %v471, %v511
  %v513 = vpop.f32.mrb[0].mxu0
  %v514 = vpop.f32.mrb[0].mxu0
  %v515 = vadd.f32 %v474, %v514
  %v516 = vpop.f32.mrb[0].mxu0
  %517 = vdwg.mxu0
  %v518 = vmax.f32 %v512, 0.0
  %v519 = vmax.f32 %v515, 0.0
  %v520 = vpack.c.bf16 %v519, %v518
  %v521 = vld [vmem:[%s3] sm:$0xf]
  %v522 = vld [vmem:[%s3 + $0x4] sm:$0xf]
  %v523 = vld [vmem:[%s3 + $0x8] sm:$0xf]
  %v524 = vld [vmem:[%s3 + $0xc] sm:$0xf]
  %v525 = vld [vmem:[%s3 + $0x10] sm:$0xf]
  %v526 = vld [vmem:[%s3 + $0x14] sm:$0xf]
  %v527 = vld [vmem:[%s3 + $0x18] sm:$0xf]
  %v528 = vld [vmem:[%s3 + $0x1c] sm:$0xf]
  %v529 = vld [vmem:[%s3 + $0x20] sm:$0xf]
  %v530 = vld [vmem:[%s3 + $0x24] sm:$0xf]
  %v531 = vld [vmem:[%s3 + $0x28] sm:$0xf]
  %v532 = vld [vmem:[%s3 + $0x2c] sm:$0xf]
  %v533 = vld [vmem:[%s3 + $0x30] sm:$0xf]
  %v534 = vld [vmem:[%s3 + $0x34] sm:$0xf]
  %v535 = vld [vmem:[%s3 + $0x38] sm:$0xf]
  %v536 = vld [vmem:[%s3 + $0x3c] sm:$0xf]
  %v537 = vld [vmem:[%s4] sm:$0x1]
  %v539 = vlaneseq
  %v540 = vshrl.u32 %v539, 7
  %v541 = vsub.s32 0, %v540
  %v542 = vrot.slane %v537, %v541
  %v560 = vunpack.c.l.b16 %v521
  %v561 = vunpack.c.l.b16 %v522
  %v562 = vunpack.c.l.b16 %v523
  %v563 = vunpack.c.l.b16 %v524
  %v564 = vunpack.c.l.b16 %v525
  %v565 = vunpack.c.l.b16 %v526
  %v566 = vunpack.c.l.b16 %v527
  %v567 = vunpack.c.l.b16 %v528
  %v568 = vunpack.c.l.b16 %v529
  %v569 = vunpack.c.l.b16 %v530
  %v570 = vunpack.c.l.b16 %v531
  %v571 = vunpack.c.l.b16 %v532
  %v572 = vunpack.c.l.b16 %v533
  %v573 = vunpack.c.l.b16 %v534
  %v574 = vunpack.c.l.b16 %v535
  %v575 = vunpack.c.l.b16 %v536
  %v576 = vpack.c.b16 %v561, %v560
  %v577 = vpack.c.b16 %v563, %v562
  %v578 = vpack.c.b16 %v565, %v564
  %v579 = vpack.c.b16 %v567, %v566
  %v580 = vpack.c.b16 %v569, %v568
  %v581 = vpack.c.b16 %v571, %v570
  %v582 = vpack.c.b16 %v573, %v572
  %v583 = vpack.c.b16 %v575, %v574
  %592 = vmatprep.subr.bf16.mxu0 0
  %593 = vmatpush1.bf16.msra.mxu0 %v576
  %594 = vmatprep.subr.bf16.mxu0 0
  %595 = vmatpush1.bf16.msra.mxu0 %v577
  %596 = vmatprep.subr.bf16.mxu0 0
  %597 = vmatpush1.bf16.msra.mxu0 %v578
  %598 = vmatprep.subr.bf16.mxu0 0
  %599 = vmatpush1.bf16.msra.mxu0 %v579
  %600 = vmatprep.subr.bf16.mxu0 0
  %601 = vmatpush1.bf16.msra.mxu0 %v580
  %602 = vmatprep.subr.bf16.mxu0 0
  %603 = vmatpush1.bf16.msra.mxu0 %v581
  %604 = vmatprep.subr.bf16.mxu0 0
  %605 = vmatpush1.bf16.msra.mxu0 %v582
  %606 = vmatprep.subr.bf16.mxu0 0
  %607 = vmatpush1.bf16.msra.mxu0 %v583
  %608 = vmatprep.subr.bf16.mxu0 0
  %609 = vmatpush1.bf16.msra.mxu0 0
  %610 = vmatprep.subr.bf16.mxu0 0
  %611 = vmatpush1.bf16.msra.mxu0 0
  %612 = vmatprep.subr.bf16.mxu0 0
  %613 = vmatpush1.bf16.msra.mxu0 0
  %614 = vmatprep.subr.bf16.mxu0 0
  %615 = vmatpush1.bf16.msra.mxu0 0
  %616 = vmatprep.subr.bf16.mxu0 0
  %617 = vmatpush1.bf16.msra.mxu0 0
  %618 = vmatprep.subr.bf16.mxu0 0
  %619 = vmatpush1.bf16.msra.mxu0 0
  %620 = vmatprep.subr.bf16.mxu0 0
  %621 = vmatpush1.bf16.msra.mxu0 0
  %622 = vmatprep.subr.bf16.mxu0 0
  %623 = vmatpush1.bf16.msra.mxu0 0
  %624 = vmatprep.mubr.bf16.mxu0 0
  %625 = vmatmul.mubr.bf16.gmra.mrb[0].mxu0 %v520
  %v626 = vpop.f32.mrb[0].mxu0
  %v627 = vadd.f32 %v542, %v626
  %v628 = vpop.f32.mrb[0].mxu0
  %v629 = vpop.f32.mrb[0].mxu0
  %v630 = vadd.f32 %v542, %v629
  %v631 = vpop.f32.mrb[0].mxu0
  %632 = vdwg.mxu0
  %v633 = vmax.f32 %v627, 0.0
  %v634 = vmax.f32 %v630, 0.0
  %v635 = vpack.c.bf16 %v634, %v633
  %v636 = vld [vmem:[%s5] sm:$0xf]
  %v637 = vld [vmem:[%s5 + $0x4] sm:$0xf]
  %v638 = vld [vmem:[%s5 + $0x8] sm:$0xf]
  %v639 = vld [vmem:[%s5 + $0xc] sm:$0xf]
  %v640 = vld [vmem:[%s5 + $0x10] sm:$0xf]
  %v641 = vld [vmem:[%s5 + $0x14] sm:$0xf]
  %v642 = vld [vmem:[%s5 + $0x18] sm:$0xf]
  %v643 = vld [vmem:[%s5 + $0x1c] sm:$0xf]
  %v644 = vld [vmem:[%s5 + $0x20] sm:$0xf]
  %v645 = vld [vmem:[%s5 + $0x24] sm:$0xf]
  %v646 = vld [vmem:[%s5 + $0x28] sm:$0xf]
  %v647 = vld [vmem:[%s5 + $0x2c] sm:$0xf]
  %v648 = vld [vmem:[%s5 + $0x30] sm:$0xf]
  %v649 = vld [vmem:[%s5 + $0x34] sm:$0xf]
  %v650 = vld [vmem:[%s5 + $0x38] sm:$0xf]
  %v651 = vld [vmem:[%s5 + $0x3c] sm:$0xf]
  %v652 = vld [vmem:[%s6] sm:$0x1]
  %v654 = vlaneseq
  %v655 = vshrl.u32 %v654, 7
  %v656 = vsub.s32 0, %v655
  %v657 = vrot.slane %v652, %v656
  %v675 = vunpack.c.l.b16 %v636
  %v676 = vunpack.c.l.b16 %v637
  %v677 = vunpack.c.l.b16 %v638
  %v678 = vunpack.c.l.b16 %v639
  %v679 = vunpack.c.l.b16 %v640
  %v680 = vunpack.c.l.b16 %v641
  %v681 = vunpack.c.l.b16 %v642
  %v682 = vunpack.c.l.b16 %v643
  %v683 = vunpack.c.l.b16 %v644
  %v684 = vunpack.c.l.b16 %v645
  %v685 = vunpack.c.l.b16 %v646
  %v686 = vunpack.c.l.b16 %v647
  %v687 = vunpack.c.l.b16 %v648
  %v688 = vunpack.c.l.b16 %v649
  %v689 = vunpack.c.l.b16 %v650
  %v690 = vunpack.c.l.b16 %v651
  %v691 = vpack.c.b16 %v676, %v675
  %v692 = vpack.c.b16 %v678, %v677
  %v693 = vpack.c.b16 %v680, %v679
  %v694 = vpack.c.b16 %v682, %v681
  %v695 = vpack.c.b16 %v684, %v683
  %v696 = vpack.c.b16 %v686, %v685
  %v697 = vpack.c.b16 %v688, %v687
  %v698 = vpack.c.b16 %v690, %v689
  %707 = vmatprep.subr.bf16.mxu0 0
  %708 = vmatpush1.bf16.msra.mxu0 %v691
  %709 = vmatprep.subr.bf16.mxu0 0
  %710 = vmatpush1.bf16.msra.mxu0 %v692
  %711 = vmatprep.subr.bf16.mxu0 0
  %712 = vmatpush1.bf16.msra.mxu0 %v693
  %713 = vmatprep.subr.bf16.mxu0 0
  %714 = vmatpush1.bf16.msra.mxu0 %v694
  %715 = vmatprep.subr.bf16.mxu0 0
  %716 = vmatpush1.bf16.msra.mxu0 %v695
  %717 = vmatprep.subr.bf16.mxu0 0
  %718 = vmatpush1.bf16.msra.mxu0 %v696
  %719 = vmatprep.subr.bf16.mxu0 0
  %720 = vmatpush1.bf16.msra.mxu0 %v697
  %721 = vmatprep.subr.bf16.mxu0 0
  %722 = vmatpush1.bf16.msra.mxu0 %v698
  %723 = vmatprep.subr.bf16.mxu0 0
  %724 = vmatpush1.bf16.msra.mxu0 0
  %725 = vmatprep.subr.bf16.mxu0 0
  %726 = vmatpush1.bf16.msra.mxu0 0
  %727 = vmatprep.subr.bf16.mxu0 0
  %728 = vmatpush1.bf16.msra.mxu0 0
  %729 = vmatprep.subr.bf16.mxu0 0
  %730 = vmatpush1.bf16.msra.mxu0 0
  %731 = vmatprep.subr.bf16.mxu0 0
  %732 = vmatpush1.bf16.msra.mxu0 0
  %733 = vmatprep.subr.bf16.mxu0 0
  %734 = vmatpush1.bf16.msra.mxu0 0
  %735 = vmatprep.subr.bf16.mxu0 0
  %736 = vmatpush1.bf16.msra.mxu0 0
  %737 = vmatprep.subr.bf16.mxu0 0
  %738 = vmatpush1.bf16.msra.mxu0 0
  %739 = vmatprep.mubr.bf16.mxu0 0
  %740 = vmatmul.mubr.bf16.gmra.mrb[0].mxu0 %v635
  %v741 = vpop.f32.mrb[0].mxu0
  %v742 = vadd.f32 %v657, %v741
  %v743 = vpop.f32.mrb[0].mxu0
  %v744 = vpop.f32.mrb[0].mxu0
  %v745 = vadd.f32 %v657, %v744
  %v746 = vpop.f32.mrb[0].mxu0
  %747 = vdwg.mxu0
  %v748 = vmax.f32 %v742, 0.0
  %v749 = vmax.f32 %v745, 0.0
  %v750 = vpack.c.bf16 %v749, %v748
  %v751 = vld [vmem:[%s7] sm:$0xf]
  %v752 = vld [vmem:[%s7 + $0x4] sm:$0xf]
  %v753 = vld [vmem:[%s7 + $0x8] sm:$0xf]
  %v754 = vld [vmem:[%s7 + $0xc] sm:$0xf]
  %v755 = vld [vmem:[%s7 + $0x10] sm:$0xf]
  %v756 = vld [vmem:[%s7 + $0x14] sm:$0xf]
  %v757 = vld [vmem:[%s7 + $0x18] sm:$0xf]
  %v758 = vld [vmem:[%s7 + $0x1c] sm:$0xf]
  %v759 = vld [vmem:[%s7 + $0x20] sm:$0xf]
  %v760 = vld [vmem:[%s7 + $0x24] sm:$0xf]
  %v761 = vld [vmem:[%s7 + $0x28] sm:$0xf]
  %v762 = vld [vmem:[%s7 + $0x2c] sm:$0xf]
  %v763 = vld [vmem:[%s7 + $0x30] sm:$0xf]
  %v764 = vld [vmem:[%s7 + $0x34] sm:$0xf]
  %v765 = vld [vmem:[%s7 + $0x38] sm:$0xf]
  %v766 = vld [vmem:[%s7 + $0x3c] sm:$0xf]
  %v767 = vld [vmem:[%s8] sm:$0x1]
  %v769 = vlaneseq
  %v770 = vshrl.u32 %v769, 7
  %v771 = vsub.s32 0, %v770
  %v772 = vrot.slane %v767, %v771
  %v790 = vunpack.c.l.b16 %v751
  %v791 = vunpack.c.l.b16 %v752
  %v792 = vunpack.c.l.b16 %v753
  %v793 = vunpack.c.l.b16 %v754
  %v794 = vunpack.c.l.b16 %v755
  %v795 = vunpack.c.l.b16 %v756
  %v796 = vunpack.c.l.b16 %v757
  %v797 = vunpack.c.l.b16 %v758
  %v798 = vunpack.c.l.b16 %v759
  %v799 = vunpack.c.l.b16 %v760
  %v800 = vunpack.c.l.b16 %v761
  %v801 = vunpack.c.l.b16 %v762
  %v802 = vunpack.c.l.b16 %v763
  %v803 = vunpack.c.l.b16 %v764
  %v804 = vunpack.c.l.b16 %v765
  %v805 = vunpack.c.l.b16 %v766
  %v806 = vpack.c.b16 %v791, %v790
  %v807 = vpack.c.b16 %v793, %v792
  %v808 = vpack.c.b16 %v795, %v794
  %v809 = vpack.c.b16 %v797, %v796
  %v810 = vpack.c.b16 %v799, %v798
  %v811 = vpack.c.b16 %v801, %v800
  %v812 = vpack.c.b16 %v803, %v802
  %v813 = vpack.c.b16 %v805, %v804
  %822 = vmatprep.subr.bf16.mxu0 0
  %823 = vmatpush1.bf16.msra.mxu0 %v806
  %824 = vmatprep.subr.bf16.mxu0 0
  %825 = vmatpush1.bf16.msra.mxu0 %v807
  %826 = vmatprep.subr.bf16.mxu0 0
  %827 = vmatpush1.bf16.msra.mxu0 %v808
  %828 = vmatprep.subr.bf16.mxu0 0
  %829 = vmatpush1.bf16.msra.mxu0 %v809
  %830 = vmatprep.subr.bf16.mxu0 0
  %831 = vmatpush1.bf16.msra.mxu0 %v810
  %832 = vmatprep.subr.bf16.mxu0 0
  %833 = vmatpush1.bf16.msra.mxu0 %v811
  %834 = vmatprep.subr.bf16.mxu0 0
  %835 = vmatpush1.bf16.msra.mxu0 %v812
  %836 = vmatprep.subr.bf16.mxu0 0
  %837 = vmatpush1.bf16.msra.mxu0 %v813
  %838 = vmatprep.subr.bf16.mxu0 0
  %839 = vmatpush1.bf16.msra.mxu0 0
  %840 = vmatprep.subr.bf16.mxu0 0
  %841 = vmatpush1.bf16.msra.mxu0 0
  %842 = vmatprep.subr.bf16.mxu0 0
  %843 = vmatpush1.bf16.msra.mxu0 0
  %844 = vmatprep.subr.bf16.mxu0 0
  %845 = vmatpush1.bf16.msra.mxu0 0
  %846 = vmatprep.subr.bf16.mxu0 0
  %847 = vmatpush1.bf16.msra.mxu0 0
  %848 = vmatprep.subr.bf16.mxu0 0
  %849 = vmatpush1.bf16.msra.mxu0 0
  %850 = vmatprep.subr.bf16.mxu0 0
  %851 = vmatpush1.bf16.msra.mxu0 0
  %852 = vmatprep.subr.bf16.mxu0 0
  %853 = vmatpush1.bf16.msra.mxu0 0
  %854 = vmatprep.mubr.bf16.mxu0 0
  %855 = vmatmul.mubr.bf16.gmra.mrb[0].mxu0 %v750
  %v856 = vpop.f32.mrb[0].mxu0
  %v857 = vadd.f32 %v772, %v856
  %v858 = vpop.f32.mrb[0].mxu0
  %v859 = vpop.f32.mrb[0].mxu0
  %v860 = vadd.f32 %v772, %v859
  %v861 = vpop.f32.mrb[0].mxu0
  %862 = vdwg.mxu0
  %v863 = vmax.f32 %v857, 0.0
  %v864 = vmax.f32 %v860, 0.0
  %v865 = vld [vmem:[%s9] sm:$0x1]
  %v867 = vlaneseq
  %v868 = vshrl.u32 %v867, 7
  %v869 = vsub.s32 0, %v868
  %v870 = vrot.slane %v865, %v869
  %v872 = vmul.f32 %v863, %v870
  %v873 = vmul.f32 %v864, %v870
  %874 = vadd.xlane.f32.xlu0 %v872
  %v875 = vpop.xlane.xlu0 %874
  %876 = vadd.xlane.f32.xlu0 %v873
  %v877 = vpop.xlane.xlu0 %876
  %s878 = sld [smem:[#allocation3]]
  %v879 = vstv %s878
  %v880 = vadd.f32 %v875, %v879
  %v881 = vadd.f32 %v877, %v879
  %vm882 = vcmask 7168
  %883 = vst.msk [vmem:[%s11] sm:$0xff] %vm882, %v880
  %884 = vst.msk [vmem:[%s11 + $0x8] sm:$0xff] %vm882, %v881
  // Predicated region
  $region46: #{mlp_forward.1} parent=0 // pred_check
    _
  $region47: #{mlp_forward.1} parent=0 // pred_check_branch
    %886 = sbr.rel (0) target = $region49
  $region48: #{mlp_forward.1} parent=0 // pred_region
    _
  $region49: #{mlp_forward.1} parent=0 // pred_fallthru
    _
  // Predicated region
  $region50: #{mlp_forward.1} parent=0 // pred_check
    _
  $region51: #{mlp_forward.1} parent=0 // pred_check_branch
    %888 = sbr.rel (0) target = $region53
  $region52: #{mlp_forward.1} parent=0 // pred_region
    _
  $region53: #{mlp_forward.1} parent=0 // pred_fallthru
    _

</llo_original>
